<compile_context>
chip_gen: v5e
topology: v5e:2x2
jax: 0.10.0
libtpu: 0.0.40
codegen_flags: <defaults>
</compile_context>

<pallas_src>
import functools

import jax
import jax.numpy as jnp
from jax.experimental import pallas as pl
from jax.experimental.pallas import tpu as pltpu

_BN_EPS = 1e-5
_LANE = 128


def _round_up(v, m):
    return ((v + m - 1) // m) * m


# ---------------------------------------------------------------------------
# Pass 1: per-tile h = x @ W1 ; accumulate batch sum and sum-of-squares.
# Rows outside the real batch (ragged tail / over-provisioned split) are masked.
# ---------------------------------------------------------------------------
def _stats_kernel(x_ref, w1_ref, stats_ref, *, n_rows, tile_n):
    @pl.when(pl.program_id(1) == 0)
    def _():
        stats_ref[...] = jnp.zeros_like(stats_ref)

    h = jnp.dot(x_ref[...].astype(jnp.bfloat16), w1_ref[...],
                preferred_element_type=jnp.float32)
    row0 = (pl.program_id(0) * pl.num_programs(1) + pl.program_id(1)) * tile_n
    rid = row0 + jax.lax.broadcasted_iota(jnp.int32, (tile_n, 1), 0)
    hm = jnp.where(rid < n_rows, h, 0.0)
    stats_ref[0:1, :] += jnp.sum(hm, axis=0, keepdims=True)
    stats_ref[1:2, :] += jnp.sum(hm * hm, axis=0, keepdims=True)


def _stats_spill_kernel(x_ref, w1_ref, stats_ref, h_ref, *, n_rows, tile_n):
    @pl.when(pl.program_id(1) == 0)
    def _():
        stats_ref[...] = jnp.zeros_like(stats_ref)

    h = jnp.dot(x_ref[...].astype(jnp.bfloat16), w1_ref[...],
                preferred_element_type=jnp.float32)
    row0 = (pl.program_id(0) * pl.num_programs(1) + pl.program_id(1)) * tile_n
    rid = row0 + jax.lax.broadcasted_iota(jnp.int32, (tile_n, 1), 0)
    hm = jnp.where(rid < n_rows, h, 0.0)
    stats_ref[0:1, :] += jnp.sum(hm, axis=0, keepdims=True)
    stats_ref[1:2, :] += jnp.sum(hm * hm, axis=0, keepdims=True)
    h_ref[...] = h.astype(h_ref.dtype)          # OOB rows dropped by masked store


# ---------------------------------------------------------------------------
# Pass 2: BN (pre-folded scale/shift) + ReLU + second matmul + bias.
# ---------------------------------------------------------------------------
def _apply_recompute_kernel(scale_ref, shift_ref, x_ref, w1_ref, w2_ref, b2_ref,
                            o_ref):
    h = jnp.dot(x_ref[...].astype(jnp.bfloat16), w1_ref[...],
                preferred_element_type=jnp.float32)
    a = jnp.maximum(h * scale_ref[...] + shift_ref[...], 0.0)
    y = jnp.dot(a.astype(jnp.bfloat16), w2_ref[...],
                preferred_element_type=jnp.float32)
    o_ref[...] = (y + b2_ref[...]).astype(o_ref.dtype)


def _apply_spill_kernel(scale_ref, shift_ref, h_ref, w2_ref, b2_ref, o_ref):
    h = h_ref[...].astype(jnp.float32)
    a = jnp.maximum(h * scale_ref[...] + shift_ref[...], 0.0)
    y = jnp.dot(a.astype(jnp.bfloat16), w2_ref[...],
                preferred_element_type=jnp.float32)
    o_ref[...] = (y + b2_ref[...]).astype(o_ref.dtype)


# ---------------------------------------------------------------------------
# Wrapper
# ---------------------------------------------------------------------------
def domain_transfer(x, w1_t, gamma, beta, w2_t, b2, *, spill_h=None,
                    tile_n=None, out_dtype=None):
    """x: (N, in_dim). w1_t: (in_dim, out_dim). w2_t: (out_dim, out_dim).
    gamma/beta/b2: (out_dim,) or (1, out_dim). Returns (N, out_dim)."""
    n, in_dim = x.shape
    out_dim = w1_t.shape[1]
    out_pad = _round_up(out_dim, _LANE)
    f32, bf16 = jnp.float32, jnp.bfloat16
    out_dtype = x.dtype if out_dtype is None else out_dtype

    # Row tile: 512 amortizes per-grid-step overhead (~85% HBM roofline on
    # mem-bound passes).  Multiple of 16 so bf16 h tiles are sublane-aligned.
    if tile_n is None:
        tile_n = min(512, _round_up(n, 16))
    else:
        tile_n = _round_up(tile_n, 16)
    n_tiles = pl.cdiv(n, tile_n)

    if spill_h is None:
        # Spill h when the op is MXU-bound (large K); recompute when mem-bound.
        spill_h = in_dim >= 512

    # Pass-1 megacore split (v7x): 2-way over row tiles when it divides evenly.
    n_splits = 2 if (n_tiles >= 2 and n_tiles % 2 == 0) else 1
    tiles_per_split = n_tiles // n_splits

    # Weights / BN params padded to lane-dense out_pad (one-time, tiny).
    w1_p = jnp.zeros((in_dim, out_pad), bf16).at[:, :out_dim].set(
        w1_t.astype(bf16))
    w2_p = jnp.zeros((out_pad, out_pad), bf16).at[:out_dim, :out_dim].set(
        w2_t.astype(bf16))
    gamma_p = jnp.ones((1, out_pad), f32).at[:, :out_dim].set(
        gamma.reshape(1, -1).astype(f32))
    beta_p = jnp.zeros((1, out_pad), f32).at[:, :out_dim].set(
        beta.reshape(1, -1).astype(f32))
    b2_p = jnp.zeros((1, out_pad), f32).at[:, :out_dim].set(
        b2.reshape(1, -1).astype(f32))

    # Explicit VMEM budget (double-buffered upper bound) instead of the 32 MiB
    # scoped default.
    x_bytes = jnp.dtype(x.dtype).itemsize
    o_bytes = jnp.dtype(out_dtype).itemsize
    resident = in_dim * out_pad * 2 + out_pad * out_pad * 2 + 16 * out_pad * 4
    per_tile = tile_n * (in_dim * x_bytes + out_pad * 2 + out_pad * o_bytes)
    vmem_limit = min(int(2 * (resident + per_tile)) + (4 << 20), 112 << 20)

    # ---- Pass 1: batch sum / sum-of-squares of h = x @ W1 ------------------
    stats_kernel = _stats_spill_kernel if spill_h else _stats_kernel
    out_shape_1 = [jax.ShapeDtypeStruct((8 * n_splits, out_pad), f32)]
    out_specs_1 = [pl.BlockSpec((8, out_pad), lambda s, i: (s, 0))]
    if spill_h:
        out_shape_1.append(jax.ShapeDtypeStruct((n, out_pad), bf16))
        out_specs_1.append(
            pl.BlockSpec((tile_n, out_pad),
                         lambda s, i: (s * tiles_per_split + i, 0)))

    pass1_out = pl.pallas_call(
        functools.partial(stats_kernel, n_rows=n, tile_n=tile_n),
        out_shape=tuple(out_shape_1),
        grid=(n_splits, tiles_per_split),
        in_specs=[
            pl.BlockSpec((tile_n, in_dim),
                         lambda s, i: (s * tiles_per_split + i, 0)),   # x tile
            pl.BlockSpec((in_dim, out_pad), lambda s, i: (0, 0)),      # W1^T
        ],
        out_specs=tuple(out_specs_1),
        compiler_params=pltpu.CompilerParams(
            dimension_semantics=("parallel", "arbitrary"),
            vmem_limit_bytes=vmem_limit),
    )(x, w1_p)

    partial_stats = pass1_out[0]
    h_spilled = pass1_out[1] if spill_h else None

    # ---- Hoisted BN fold: scale / shift computed once on (1, out_pad) ------
    stats = partial_stats.reshape(n_splits, 8, out_pad).sum(axis=0)
    inv_n = 1.0 / n
    mean = stats[0:1, :] * inv_n
    # NOTE: E[h^2] - E[h]^2 in f32; clamp guards the rare cancellation case.
    var = jnp.maximum(stats[1:2, :] * inv_n - mean * mean, 0.0)
    scale = gamma_p * jax.lax.rsqrt(var + _BN_EPS)
    shift = beta_p - mean * scale

    # ---- Pass 2: normalize + ReLU + second matmul + bias -------------------
    if spill_h:
        apply_kernel = _apply_spill_kernel
        in_specs_2 = [
            pl.BlockSpec((1, out_pad), lambda i: (0, 0)),        # scale
            pl.BlockSpec((1, out_pad), lambda i: (0, 0)),        # shift
            pl.BlockSpec((tile_n, out_pad), lambda i: (i, 0)),   # spilled h
            pl.BlockSpec((out_pad, out_pad), lambda i: (0, 0)),  # W2^T
            pl.BlockSpec((1, out_pad), lambda i: (0, 0)),        # b2
        ]
        args_2 = (scale, shift, h_spilled, w2_p, b2_p)
    else:
        apply_kernel = _apply_recompute_kernel
        in_specs_2 = [
            pl.BlockSpec((1, out_pad), lambda i: (0, 0)),        # scale
            pl.BlockSpec((1, out_pad), lambda i: (0, 0)),        # shift
            pl.BlockSpec((tile_n, in_dim), lambda i: (i, 0)),    # x tile
            pl.BlockSpec((in_dim, out_pad), lambda i: (0, 0)),   # W1^T
            pl.BlockSpec((out_pad, out_pad), lambda i: (0, 0)),  # W2^T
            pl.BlockSpec((1, out_pad), lambda i: (0, 0)),        # b2
        ]
        args_2 = (scale, shift, x, w1_p, w2_p, b2_p)

    y_p = pl.pallas_call(
        apply_kernel,
        out_shape=jax.ShapeDtypeStruct((n, out_pad), out_dtype),
        grid=(n_tiles,),
        in_specs=in_specs_2,
        out_specs=pl.BlockSpec((tile_n, out_pad), lambda i: (i, 0)),
        compiler_params=pltpu.CompilerParams(
            dimension_semantics=("parallel",),
            vmem_limit_bytes=vmem_limit),
    )(*args_2)

    return y_p[:, :out_dim]


# ---------------------------------------------------------------------------
# Pure-JAX f32 reference (PyTorch training-mode forward semantics).
# ---------------------------------------------------------------------------
def _reference(x, w1_t, gamma, beta, w2_t, b2):
    h = x @ w1_t
    mean = jnp.mean(h, axis=0, keepdims=True)
    var = jnp.mean((h - mean) ** 2, axis=0, keepdims=True)
    h = (h - mean) * jax.lax.rsqrt(var + _BN_EPS) * gamma + beta
    h = jnp.maximum(h, 0.0)
    return h @ w2_t + b2


if __name__ == "__main__":
    # Small deterministic setup consistent with the module's forward:
    # batch=32, in_dim=32, out_dim=32.
    N, IN_DIM, OUT_DIM = 32, 32, 32
    key = jax.random.PRNGKey(0)
    kx, kw1, kw2, kg = jax.random.split(key, 4)

    x = jax.random.normal(kx, (N, IN_DIM), dtype=jnp.float32)

    # Deterministic "kaiming-style" init (fan_out normal), BN weight ~ N(1, .02).
    w1 = jax.random.normal(kw1, (OUT_DIM, IN_DIM), jnp.float32) * jnp.sqrt(2.0 / OUT_DIM)
    w2 = jax.random.normal(kw2, (OUT_DIM, OUT_DIM), jnp.float32) * jnp.sqrt(2.0 / OUT_DIM)
    b2 = jnp.zeros((1, OUT_DIM), jnp.float32)
    gamma = 1.0 + 0.02 * jax.random.normal(kg, (1, OUT_DIM), jnp.float32)
    beta = jnp.zeros((1, OUT_DIM), jnp.float32)

    # Pre-transpose Linear weights for row-major MXU dots.
    w1_t = w1.T  # (IN_DIM, OUT_DIM)
    w2_t = w2.T  # (OUT_DIM, OUT_DIM)

    ref = _reference(x, w1_t, gamma, beta, w2_t, b2)

    # 1) Default path (recompute h; single row tile).
    out = jax.block_until_ready(domain_transfer(x, w1_t, gamma, beta, w2_t, b2))
    assert out.shape == (N, OUT_DIM)
    assert jnp.allclose(out, ref, atol=5e-2, rtol=5e-2), "mismatch (default path)"

    # 2) Spilled-h path with small row tile: exercises multi-tile stats
    #    accumulation and the 2-way (v7x megacore) pass-1 split.
    out2 = jax.block_until_ready(
        domain_transfer(x, w1_t, gamma, beta, w2_t, b2, spill_h=True, tile_n=16))
    assert jnp.allclose(out2, ref, atol=5e-2, rtol=5e-2), "mismatch (spill path)"

    # 3) Ragged batch (masked tail rows, no host-side padding of x).
    xr = x[:27]
    refr = _reference(xr, w1_t, gamma, beta, w2_t, b2)
    outr = jax.block_until_ready(
        domain_transfer(xr, w1_t, gamma, beta, w2_t, b2, tile_n=16))
    assert outr.shape == (27, OUT_DIM)
    assert jnp.allclose(outr, refr, atol=5e-2, rtol=5e-2), "mismatch (ragged path)"

    print("KERNEL_OK")
</pallas_src>

<mosaic_0001>
module attributes {stable_mosaic.version = 11 : i64} {
  func.func @_stats_kernel(%arg0: i32, %arg1: i32, %arg2: memref<32x32xf32, #tpu.memory_space<vmem>>, %arg3: memref<32x128xbf16, #tpu.memory_space<vmem>>, %arg4: memref<8x128xf32, #tpu.memory_space<vmem>>) attributes {dimension_semantics = [#tpu.dimension_semantics<parallel>, #tpu.dimension_semantics<arbitrary>], iteration_bounds = array<i64: 1, 1>, scalar_prefetch = 0 : i64, scratch_operands = 0 : i64, tpu.core_type = #tpu.core_type<tc>, window_params = [{transform_indices = @transform_0, window_bounds = array<i64: 32, 32>}, {pipeline_mode = #tpu.pipeline_mode<synchronous>, transform_indices = @transform_1, window_bounds = array<i64: 32, 128>}, {transform_indices = @transform_2, window_bounds = array<i64: 8, 128>}]} {
    %c0_i32 = arith.constant 0 : i32
    %0 = arith.cmpi eq, %arg1, %c0_i32 : i32
    %1 = arith.extui %0 : i1 to i32
    %c0_i32_0 = arith.constant 0 : i32
    %2 = arith.cmpi ne, %1, %c0_i32_0 : i32
    scf.if %2 {
      %cst_15 = arith.constant 0.000000e+00 : f32
      %30 = vector.broadcast %cst_15 : f32 to vector<8x128xf32>
      %c0_16 = arith.constant 0 : index
      %c0_17 = arith.constant 0 : index
      %31 = vector.load %arg4[%c0_16, %c0_17] : memref<8x128xf32, #tpu.memory_space<vmem>>, vector<8x128xf32>
      tpu.vector_store %arg4[%c0_16, %c0_17], %30 {strides = array<i32>} : memref<8x128xf32, #tpu.memory_space<vmem>>, vector<8x128xf32>,
    } else {
    }
    %c0 = arith.constant 0 : index
    %c0_1 = arith.constant 0 : index
    %3 = vector.load %arg2[%c0, %c0_1] : memref<32x32xf32, #tpu.memory_space<vmem>>, vector<32x32xf32>
    %4 = arith.truncf %3 : vector<32x32xf32> to vector<32x32xbf16>
    %c0_2 = arith.constant 0 : index
    %c0_3 = arith.constant 0 : index
    %5 = vector.load %arg3[%c0_2, %c0_3] : memref<32x128xbf16, #tpu.memory_space<vmem>>, vector<32x128xbf16>
    %cst = arith.constant dense<0.000000e+00> : vector<32x128xf32>
    %6 = tpu.matmul %4, %5, %cst {dimension_numbers = #tpu.dot_dimension_numbers<[1], [0], [0], [1], [0, 0, 1, 1], [], []>} : vector<32x32xbf16>, vector<32x128xbf16>, vector<32x128xf32> -> vector<32x128xf32>
    %c1_i32 = arith.constant 1 : i32
    %7 = arith.muli %arg0, %c1_i32 : i32
    %8 = arith.addi %7, %arg1 : i32
    %c32_i32 = arith.constant 32 : i32
    %9 = arith.muli %8, %c32_i32 : i32
    %10 = tpu.iota {dimensions = array<i32: 0>} : vector<32x1xi32>
    %11 = vector.broadcast %9 : i32 to vector<32x1xi32>
    %12 = arith.addi %11, %10 : vector<32x1xi32>
    %c32_i32_4 = arith.constant 32 : i32
    %13 = vector.broadcast %c32_i32_4 : i32 to vector<32x1xi32>
    %14 = arith.cmpi slt, %12, %13 : vector<32x1xi32>
    %cst_5 = arith.constant 0.000000e+00 : f32
    %15 = vector.shape_cast %14 : vector<32x1xi1> to vector<32x1xi1>
    %16 = vector.broadcast %15 : vector<32x1xi1> to vector<32x128xi1>
    %17 = vector.broadcast %cst_5 : f32 to vector<32x128xf32>
    %18 = arith.select %16, %6, %17 : vector<32x128xi1>, vector<32x128xf32>
    %c0_6 = arith.constant 0 : index
    %c0_7 = arith.constant 0 : index
    %19 = vector.load %arg4[%c0_6, %c0_7] : memref<8x128xf32, #tpu.memory_space<vmem>>, vector<1x128xf32>
    %cst_8 = arith.constant dense<0.000000e+00> : vector<128xf32>
    %20 = vector.multi_reduction <add>, %18, %cst_8 [0] : vector<32x128xf32> to vector<128xf32>
    %21 = vector.shape_cast %20 : vector<128xf32> to vector<1x128xf32>
    %22 = arith.addf %19, %21 : vector<1x128xf32>
    %c0_9 = arith.constant 0 : index
    %c0_10 = arith.constant 0 : index
    %23 = vector.load %arg4[%c0_9, %c0_10] : memref<8x128xf32, #tpu.memory_space<vmem>>, vector<1x128xf32>
    tpu.vector_store %arg4[%c0_9, %c0_10], %22 {strides = array<i32>} : memref<8x128xf32, #tpu.memory_space<vmem>>, vector<1x128xf32>,
    %c1 = arith.constant 1 : index
    %c0_11 = arith.constant 0 : index
    %24 = vector.load %arg4[%c1, %c0_11] : memref<8x128xf32, #tpu.memory_space<vmem>>, vector<1x128xf32>
    %25 = arith.mulf %18, %18 : vector<32x128xf32>
    %cst_12 = arith.constant dense<0.000000e+00> : vector<128xf32>
    %26 = vector.multi_reduction <add>, %25, %cst_12 [0] : vector<32x128xf32> to vector<128xf32>
    %27 = vector.shape_cast %26 : vector<128xf32> to vector<1x128xf32>
    %28 = arith.addf %24, %27 : vector<1x128xf32>
    %c1_13 = arith.constant 1 : index
    %c0_14 = arith.constant 0 : index
    %29 = vector.load %arg4[%c1_13, %c0_14] : memref<8x128xf32, #tpu.memory_space<vmem>>, vector<1x128xf32>
    tpu.vector_store %arg4[%c1_13, %c0_14], %28 {strides = array<i32>} : memref<8x128xf32, #tpu.memory_space<vmem>>, vector<1x128xf32>,
    return
  }
  func.func @transform_0(%arg0: i32, %arg1: i32) -> (i32, i32) {
    %c1_i32 = arith.constant 1 : i32
    %0 = arith.muli %arg0, %c1_i32 : i32
    %1 = arith.addi %0, %arg1 : i32
    %c0_i32 = arith.constant 0 : i32
    %c0_i32_0 = arith.constant 0 : i32
    return %1, %c0_i32 : i32, i32
  }
  func.func @transform_1(%arg0: i32, %arg1: i32) -> (i32, i32) {
    %c0_i32 = arith.constant 0 : i32
    %c0_i32_0 = arith.constant 0 : i32
    %c0_i32_1 = arith.constant 0 : i32
    return %c0_i32, %c0_i32_0 : i32, i32
  }
  func.func @transform_2(%arg0: i32, %arg1: i32) -> (i32, i32) {
    %c0_i32 = arith.constant 0 : i32
    %c0_i32_0 = arith.constant 0 : i32
    return %arg0, %c0_i32 : i32, i32
  }
}

</mosaic_0001>

<llo_original>
// kernel: tpu_custom_call.1
$region0: #{tpu_custom_call.1}
  #allocation0 [shape = 'u32[]', space=smem, size = 0x4, offset = 0x4, fixed_abs, tag = 'smem constant byte address 0x4 - core index']
  #allocation1 [shape = 'u32[72,128]{1,0:T(1,128)}', space=vmem, size = 0x9000, scoped, tag = 'internal scratch']
  %s0 = inlined_call_operand.hbm [shape: f32[32,32], index: 0, kind: input, shape index: {}]
  %s1 = inlined_call_operand.hbm [shape: bf16[32,128], index: 1, kind: input, shape index: {}]
  %s2 = inlined_call_operand.hbm [shape: f32[8,128], index: 2, kind: output, shape index: {}]
  %s3 = sld [smem:[#allocation0]]
  $region30: #{tpu_custom_call.1} parent=0
    _
  %s5 = ssub.s32 1, %s3
  %s6 = scalar_select 0, %s5, %s3
  $region1: #{tpu_custom_call.1} parent=0
    #allocation2 [shape = 'u8[16384]{0}', space=vmem, size = 0x4000, scoped, tag = 'input window, operand 0, single buffered']
    #allocation3 [shape = 's32[1]{0}', space=sflag, size = 0x4, scoped, tag = 'scoped memory for tpu_custom_call.1']
    #allocation4 [shape = 's32[1]{0}', space=sflag, size = 0x4, scoped, tag = 'scoped memory for tpu_custom_call.1']
    #allocation5 [shape = 'u8[8192]{0}', space=vmem, size = 0x2000, scoped, tag = 'input window, operand 1, single buffered']
    #allocation6 [shape = 's32[1]{0}', space=sflag, size = 0x4, scoped, tag = 'scoped memory for tpu_custom_call.1']
    #allocation7 [shape = 'u8[4096]{0}', space=vmem, size = 0x1000, scoped, tag = 'output window, operand 0, single buffered']
    %7 = vsyncpa [#allocation3], 0
    %8 = vsyncpa [#allocation6], 0
    %9 = vsyncpa [#allocation4], 0
    // Predicated region
    $region2: #{tpu_custom_call.1} parent=1 // pred_check
      _
    $region3: #{tpu_custom_call.1} parent=1 // pred_check_branch
      %11 = sbr.rel (0) target = $region5
    $region4: #{tpu_custom_call.1} parent=1 // pred_region
      %s12 = sadd.s32 0, 0
      %s13 = smul.u32 4, %s12
      %15 = vsyncadd [#allocation3], 0
      %s16 = smul.addr %s13, 8
      %s17 = scalar_lea.hbm %s0, %s16
      %s18 = sshll.u32 %s17, 4
      %s19 = int_to_ptr.hbm [resolvable:$true] %s18
      %s20 = sshll.u32 [#allocation2], 4
      %s21 = int_to_ptr.vmem [resolvable:$true] %s20
      %26 = dma.hbm_to_vmem [thread:$0]  %s19, 512, %s21, [#allocation3], 128, 128, 8
    $region5: #{tpu_custom_call.1} parent=1 // pred_fallthru
      _
    // Predicated region
    $region6: #{tpu_custom_call.1} parent=1 // pred_check
      _
    $region7: #{tpu_custom_call.1} parent=1 // pred_check_branch
      %28 = sbr.rel (0) target = $region9
    $region8: #{tpu_custom_call.1} parent=1 // pred_region
      %30 = vsyncadd [#allocation6], 0
      %s31 = sshll.u32 %s1, 4
      %s32 = int_to_ptr.hbm [resolvable:$true] %s31
      %s33 = sshll.u32 [#allocation5], 4
      %s34 = int_to_ptr.vmem [resolvable:$true] %s33
      %39 = dma.hbm_to_vmem [thread:$0]  %s32, 256, %s34, [#allocation6], 64, 64, 4
    $region9: #{tpu_custom_call.1} parent=1 // pred_fallthru
      _
    // Predicated region
    $region10: #{tpu_custom_call.1} parent=1 // pred_check
      _
    $region11: #{tpu_custom_call.1} parent=1 // pred_check_branch
      %41 = sbr.rel (0) target = $region13
    $region12: #{tpu_custom_call.1} parent=1 // pred_region
      %43 = dma.done [#allocation3], 512
    $region13: #{tpu_custom_call.1} parent=1 // pred_fallthru
      _
    // Predicated region
    $region14: #{tpu_custom_call.1} parent=1 // pred_check
      _
    $region15: #{tpu_custom_call.1} parent=1 // pred_check_branch
      %45 = sbr.rel (0) target = $region17
    $region16: #{tpu_custom_call.1} parent=1 // pred_region
      %47 = dma.done [#allocation6], 256
    $region17: #{tpu_custom_call.1} parent=1 // pred_fallthru
      _
    %s48 = sadd.s32 0, 0
    %s49 = smul.u32 4, %s48
    %p51 = scmp.eq.s32.totalorder 0, 0
    // Predicated region
    $region18: #{tpu_custom_call.1} parent=1 // pred_check
      %p52 = pneg %p51
    $region19: #{tpu_custom_call.1} parent=1 // pred_check_branch
      %54 = sbr.rel (%p52) target = $region21
    $region20: #{tpu_custom_call.1} parent=1 // pred_region
      %55 = vst [vmem:[#allocation7] sm:$0xff] 0.0
    $region21: #{tpu_custom_call.1} parent=1 // pred_fallthru
      _
    %v56 = vld [vmem:[#allocation2] sm:$0xff]
    %v57 = vld [vmem:[#allocation2 + $0x8] sm:$0xff]
    %v58 = vld [vmem:[#allocation2 + $0x10] sm:$0xff]
    %v59 = vld [vmem:[#allocation2 + $0x18] sm:$0xff]
    %v60 = vpack.c.bf16 %v57, %v56
    %v61 = vpack.c.bf16 %v59, %v58
    %v62 = vld [vmem:[#allocation5] sm:$0xf]
    %v63 = vld [vmem:[#allocation5 + $0x4] sm:$0xf]
    %v64 = vld [vmem:[#allocation5 + $0x8] sm:$0xf]
    %v65 = vld [vmem:[#allocation5 + $0xc] sm:$0xf]
    %v70 = vunpack.c.l.b16 %v62
    %v71 = vunpack.c.l.b16 %v63
    %v72 = vunpack.c.l.b16 %v64
    %v73 = vunpack.c.l.b16 %v65
    %v74 = vpack.c.b16 %v71, %v70
    %v75 = vpack.c.b16 %v73, %v72
    %vm78 = vcmask 261120
    %v80 = vsel %vm78, %v60, 0
    %v83 = vsel %vm78, %v61, 0
    %85 = vmatpush.bf16.msra.mxu0 0
    %86 = vmatpush.bf16.msra.mxu0 0
    %87 = vmatpush.bf16.msra.mxu0 0
    %88 = vmatpush.bf16.msra.mxu0 0
    %89 = vmatpush.bf16.msra.mxu0 0
    %90 = vmatpush.bf16.msra.mxu0 0
    %91 = vmatpush.bf16.msra.mxu0 %v75
    %92 = vmatpush.bf16.msra.mxu0 %v74
    %93 = vmatmul.bf16.gmra.mxu0 %v80
    %v94 = vpop.f32.mrf.mxu0
    %v95 = vadd.f32 0.0, %v94
    %v96 = vpop.f32.mrf.mxu0
    %v97 = vadd.f32 0.0, %v96
    %98 = vmatmul.bf16.gmra.mxu0 %v83
    %v99 = vpop.f32.mrf.mxu0
    %v100 = vadd.f32 0.0, %v99
    %v101 = vpop.f32.mrf.mxu0
    %v102 = vadd.f32 0.0, %v101
    %103 = vdwg.mxu0
    %s104 = sadd.s32 0, 0
    %s105 = smul.u32 %s104, 32
    %v106 = vlaneseq
    %v107 = vshrl.u32 %v106, 7
    %v108 = vadd.s32 %v107, 8
    %v109 = vadd.s32 %v107, 16
    %v110 = vadd.s32 %v107, 24
    %v111 = vstv %s105
    %v112 = vadd.s32 %v111, %v107
    %v113 = vadd.s32 %v111, %v108
    %v114 = vadd.s32 %v111, %v109
    %v115 = vadd.s32 %v111, %v110
    %vm116 = vcmp.lt.s32.totalorder %v112, 32
    %vm117 = vcmp.lt.s32.totalorder %v113, 32
    %vm118 = vcmp.lt.s32.totalorder %v114, 32
    %vm119 = vcmp.lt.s32.totalorder %v115, 32
    %v120 = vsel %vm116, 1, 0
    %v121 = vsel %vm117, 1, 0
    %v122 = vsel %vm118, 1, 0
    %v123 = vsel %vm119, 1, 0
    %vm124 = vcmp.eq.s32.totalorder %v120, 1
    %vm125 = vcmp.eq.s32.totalorder %v121, 1
    %vm126 = vcmp.eq.s32.totalorder %v122, 1
    %vm127 = vcmp.eq.s32.totalorder %v123, 1
    %v128 = vsel %vm124, %v95, 0.0
    %v129 = vsel %vm125, %v97, 0.0
    %v130 = vsel %vm126, %v100, 0.0
    %v131 = vsel %vm127, %v102, 0.0
    %v132 = vld [vmem:[#allocation7] sm:$0x1]
    %v133 = vadd.f32 %v128, %v129
    %v134 = vadd.f32 %v133, %v130
    %v135 = vadd.f32 %v134, %v131
    %v136 = vrot.slane %v135, 4
    %v137 = vadd.f32 %v135, %v136
    %v138 = vrot.slane %v137, 2
    %v139 = vadd.f32 %v137, %v138
    %v140 = vrot.slane %v139, 1
    %v141 = vadd.f32 %v139, %v140
    %v142 = vadd.f32 %v132, %v141
    %143 = vst [vmem:[#allocation7] sm:$0x1] %v142
    %v144 = vld [vmem:[#allocation7 + $0x1] sm:$0x1]
    %v145 = vmul.f32 %v128, %v128
    %v146 = vmul.f32 %v129, %v129
    %v147 = vmul.f32 %v130, %v130
    %v148 = vmul.f32 %v131, %v131
    %v149 = vadd.f32 %v145, %v146
    %v150 = vadd.f32 %v149, %v147
    %v151 = vadd.f32 %v150, %v148
    %v152 = vrot.slane %v151, 4
    %v153 = vadd.f32 %v151, %v152
    %v154 = vrot.slane %v153, 2
    %v155 = vadd.f32 %v153, %v154
    %v156 = vrot.slane %v155, 1
    %v157 = vadd.f32 %v155, %v156
    %v158 = vadd.f32 %v144, %v157
    %159 = vst [vmem:[#allocation7 + $0x1] sm:$0x1] %v158
    // Predicated region
    $region22: #{tpu_custom_call.1} parent=1 // pred_check
      _
    $region23: #{tpu_custom_call.1} parent=1 // pred_check_branch
      %161 = sbr.rel (0) target = $region25
    $region24: #{tpu_custom_call.1} parent=1 // pred_region
      %163 = vsyncadd [#allocation4], 0
      %s165 = sshll.u32 [#allocation7], 4
      %s166 = int_to_ptr.vmem [resolvable:$true] %s165
      %s167 = sshll.u32 %s2, 4
      %s168 = int_to_ptr.hbm [resolvable:$true] %s167
      %170 = dma.vmem_to_hbm [thread:$0]  %s166, 128, %s168, [#allocation4]
    $region25: #{tpu_custom_call.1} parent=1 // pred_fallthru
      _
    // Predicated region
    $region26: #{tpu_custom_call.1} parent=1 // pred_check
      _
    $region27: #{tpu_custom_call.1} parent=1 // pred_check_branch
      %172 = sbr.rel (0) target = $region29
    $region28: #{tpu_custom_call.1} parent=1 // pred_region
      %174 = dma.done [#allocation4], 128
    $region29: #{tpu_custom_call.1} parent=1 // pred_fallthru
      _
    %175 = vsyncpa [#allocation3], 1
    %176 = vsyncpa [#allocation6], 1
    %177 = vsyncpa [#allocation4], 1

</llo_original>
